<compile_context>
chip_gen: v7x
topology: tpu7x:2x2x1
jax: 0.10.0
libtpu: 0.0.40
codegen_flags: <defaults>
</compile_context>

<pallas_src>
import jax
import jax.numpy as jnp
from jax.experimental import pallas as pl
from jax.experimental.pallas import tpu as pltpu

KSIZE = 3  # conv kernel size; padding = 1, zeros


def _conv1d_kernel(xs_ref, w_ref, o_ref):
    # xs_ref: (K, tile_L)        im2col-stacked input window + ones row (L on lanes)
    # w_ref : (d_model, K)       fused tap weights + bias column (grid-constant)
    # o_ref : (d_model, tile_L)  output tile (lane-dense store)
    o_ref[...] = jnp.dot(
        w_ref[...], xs_ref[...], preferred_element_type=jnp.float32
    ).astype(o_ref.dtype)


def _vmem_limit_bytes():
    # Defaults are 16 MiB (v5e) / 32 MiB (v6e, v7x); raise so bigger L tiles can
    # double-buffer, but never past half the physical capacity (v7x has 64 MiB).
    try:
        phys = pltpu.get_tpu_info().vmem_capacity_bytes
        return min(64 * 1024 * 1024, phys // 2)
    except Exception:
        return 32 * 1024 * 1024


def _pick_tile_l(l128, d_model, k_rows, in_bytes, out_bytes, vmem_budget, min_tiles):
    """Largest 128-multiple tile dividing l128 that fits the VMEM budget and
    (if possible) leaves at least `min_tiles` grid steps along L."""
    m = l128 // 128
    # Per-lane VMEM cost: double-buffered output + input blocks.
    per_lane = 2 * d_model * out_bytes + 2 * k_rows * in_bytes
    # Resident (grid-constant, still double-buffered) fused weights.
    resident = 2 * d_model * k_rows * in_bytes
    cap_lanes = max((int(vmem_budget * 0.8) - resident) // per_lane, 128)

    divisor_tiles = [d * 128 for d in range(1, m + 1) if m % d == 0]
    fitting = [t for t in divisor_tiles if t <= cap_lanes] or [128]
    # Prefer tiles that keep at least `min_tiles` L blocks (megacore parallelism).
    parallel = [t for t in fitting if l128 // t >= min_tiles]
    return max(parallel) if parallel else max(fitting)


def token_embedding(x, weight, bias, out_dtype=None):
    """x: (B, c_in, L); weight: (d_model, c_in, 3); bias: (d_model,).

    Returns (B, d_model, L), matching nn.Conv1d(c_in, d_model, 3, padding=1).
    `out_dtype` (e.g. jnp.bfloat16) halves output HBM traffic; accumulation is
    always f32 on the MXU."""
    B, c_in, L = x.shape
    d_model = weight.shape[0]
    out_dtype = x.dtype if out_dtype is None else out_dtype

    # Pad L up to a multiple of 128 so every output block is lane-dense.
    l128 = ((L + 127) // 128) * 128
    x_pad = jnp.pad(x, ((0, 0), (0, 0), (0, l128 - L)))

    # Tiny input-side prep (c_in rows only; the large d_model*L output stays in
    # native NCW layout).  im2col over the 3 taps, plus a ones row for the bias:
    #   X_stack[b, k*c_in + c, l] = x[b, c, l + k - 1]   (zeros outside [0, L))
    #   X_stack[b, 3*c_in,      l] = 1
    xp = jnp.pad(x_pad, ((0, 0), (0, 0), (1, 1)))
    taps = [xp[:, :, k:k + l128] for k in range(KSIZE)]
    ones_row = jnp.ones((B, 1, l128), x_pad.dtype)
    x_stack = jnp.concatenate(taps + [ones_row], axis=1)  # (B, K, l128)
    K = KSIZE * c_in + 1

    #   W_full[d, k*c_in + c] = weight[d, c, k];  W_full[d, 3*c_in] = bias[d]
    w_flat = jnp.transpose(weight, (0, 2, 1)).reshape(d_model, KSIZE * c_in)
    w_full = jnp.concatenate([w_flat, bias.reshape(d_model, 1)], axis=1)

    vmem_limit = _vmem_limit_bytes()
    in_bytes = jnp.dtype(x_stack.dtype).itemsize
    out_bytes = jnp.dtype(out_dtype).itemsize
    min_tiles = 2 if B < 2 else 1  # keep v7x's second TensorCore busy when B == 1
    tile_l = _pick_tile_l(l128, d_model, K, in_bytes, out_bytes, vmem_limit, min_tiles)
    n_l = l128 // tile_l

    out = pl.pallas_call(
        _conv1d_kernel,
        out_shape=jax.ShapeDtypeStruct((B, d_model, l128), out_dtype),
        grid_spec=pltpu.PrefetchScalarGridSpec(
            num_scalar_prefetch=0,
            grid=(B, n_l),
            in_specs=[
                pl.BlockSpec((None, K, tile_l), lambda b, j: (b, 0, j)),
                pl.BlockSpec((d_model, K), lambda b, j: (0, 0)),
            ],
            out_specs=pl.BlockSpec((None, d_model, tile_l), lambda b, j: (b, 0, j)),
        ),
        compiler_params=pltpu.CompilerParams(
            dimension_semantics=("parallel", "parallel"),
            vmem_limit_bytes=vmem_limit,
        ),
    )(x_stack, w_full)

    return out if l128 == L else out[:, :, :L]


def _reference(x, weight, bias):
    # Plain-JAX reference conv (same math as PyTorch Conv1d, padding=1, zeros).
    B, c_in, L = x.shape
    d_model = weight.shape[0]
    xp = jnp.pad(x, ((0, 0), (0, 0), (1, 1)))
    out = jnp.zeros((B, d_model, L), jnp.float32)
    for k in range(KSIZE):
        out = out + jnp.einsum('bcl,dc->bdl', xp[:, :, k:k + L], weight[:, :, k])
    return out + bias[None, :, None]


if __name__ == "__main__":
    # Module docstring: input (batch_size, 1, seq_len) -> (batch_size, d_model, seq_len).
    B, c_in, L, d_model = 2, 1, 16, 32

    key = jax.random.PRNGKey(0)
    kx, kw, kb = jax.random.split(key, 3)

    # Deterministic synthetic parameters (shapes from nn.Conv1d(c_in, d_model, 3)).
    fan_in = c_in * KSIZE
    bound = 1.0 / (fan_in ** 0.5)
    weight = jax.random.uniform(kw, (d_model, c_in, KSIZE), jnp.float32, -bound, bound)
    bias = jax.random.uniform(kb, (d_model,), jnp.float32, -bound, bound)

    x = jax.random.normal(kx, (B, c_in, L), jnp.float32)

    ref = _reference(x, weight, bias)

    # Default path: f32 output (matches PyTorch module semantics).
    out = jax.block_until_ready(token_embedding(x, weight, bias))
    assert out.shape == (B, d_model, L), out.shape
    assert jnp.allclose(out, ref, atol=1e-5, rtol=1e-5), "mismatch vs reference (f32)"

    # Bandwidth-optimized path: bf16 output, f32 accumulation.
    out_bf16 = jax.block_until_ready(token_embedding(x, weight, bias, out_dtype=jnp.bfloat16))
    assert out_bf16.shape == (B, d_model, L), out_bf16.shape
    assert jnp.allclose(out_bf16.astype(jnp.float32), ref, atol=5e-2, rtol=5e-2), \
        "mismatch vs reference (bf16)"

    print("KERNEL_OK")
</pallas_src>

<mosaic_0001>
module attributes {stable_mosaic.version = 11 : i64} {
  func.func @_conv1d_kernel(%arg0: i32, %arg1: i32, %arg2: memref<1x4x128xf32, #tpu.memory_space<vmem>>, %arg3: memref<32x4xf32, #tpu.memory_space<vmem>>, %arg4: memref<1x32x128xf32, #tpu.memory_space<vmem>>) attributes {dimension_semantics = [#tpu.dimension_semantics<parallel>, #tpu.dimension_semantics<parallel>], iteration_bounds = array<i64: 2, 1>, scalar_prefetch = 0 : i64, scratch_operands = 0 : i64, tpu.core_type = #tpu.core_type<tc>, window_params = [{transform_indices = @transform_0, window_bounds = array<i64: 1, 4, 128>}, {pipeline_mode = #tpu.pipeline_mode<synchronous>, transform_indices = @transform_1, window_bounds = array<i64: 32, 4>}, {transform_indices = @transform_2, window_bounds = array<i64: 1, 32, 128>}]} {
    %c0 = arith.constant 0 : index
    %c0_0 = arith.constant 0 : index
    %0 = vector.load %arg3[%c0, %c0_0] : memref<32x4xf32, #tpu.memory_space<vmem>>, vector<32x4xf32>
    %c0_1 = arith.constant 0 : index
    %c0_2 = arith.constant 0 : index
    %c0_3 = arith.constant 0 : index
    %1 = vector.load %arg2[%c0_1, %c0_2, %c0_3] : memref<1x4x128xf32, #tpu.memory_space<vmem>>, vector<1x4x128xf32>
    %2 = vector.shape_cast %1 : vector<1x4x128xf32> to vector<4x128xf32>
    %cst = arith.constant dense<0.000000e+00> : vector<32x128xf32>
    %3 = tpu.matmul %0, %2, %cst {dimension_numbers = #tpu.dot_dimension_numbers<[1], [0], [0], [1], [0, 0, 1, 1], [], []>} : vector<32x4xf32>, vector<4x128xf32>, vector<32x128xf32> -> vector<32x128xf32>
    %c0_4 = arith.constant 0 : index
    %c0_5 = arith.constant 0 : index
    %c0_6 = arith.constant 0 : index
    %4 = vector.load %arg4[%c0_4, %c0_5, %c0_6] : memref<1x32x128xf32, #tpu.memory_space<vmem>>, vector<1x32x128xf32>
    %5 = vector.shape_cast %4 : vector<1x32x128xf32> to vector<32x128xf32>
    %6 = vector.shape_cast %3 : vector<32x128xf32> to vector<1x32x128xf32>
    tpu.vector_store %arg4[%c0_4, %c0_5, %c0_6], %6 {strides = array<i32>} : memref<1x32x128xf32, #tpu.memory_space<vmem>>, vector<1x32x128xf32>,
    return
  }
  func.func @transform_0(%arg0: i32, %arg1: i32) -> (i32, i32, i32) {
    %c0_i32 = arith.constant 0 : i32
    %c0_i32_0 = arith.constant 0 : i32
    return %arg0, %c0_i32, %arg1 : i32, i32, i32
  }
  func.func @transform_1(%arg0: i32, %arg1: i32) -> (i32, i32) {
    %c0_i32 = arith.constant 0 : i32
    %c0_i32_0 = arith.constant 0 : i32
    %c0_i32_1 = arith.constant 0 : i32
    return %c0_i32, %c0_i32_0 : i32, i32
  }
  func.func @transform_2(%arg0: i32, %arg1: i32) -> (i32, i32, i32) {
    %c0_i32 = arith.constant 0 : i32
    %c0_i32_0 = arith.constant 0 : i32
    return %arg0, %c0_i32, %arg1 : i32, i32, i32
  }
}

</mosaic_0001>

<llo_original>
// kernel: tpu_custom_call.1
$region0: #{tpu_custom_call.1}
  #allocation0 [shape = 'u32[]', space=smem, size = 0x4, offset = 0x4, fixed_abs, tag = 'smem constant byte address 0x4 - core index']
  #allocation1 [shape = 'u32[144,128]{1,0:T(1,128)}', space=vmem, size = 0x12000, scoped, tag = 'internal scratch']
  %s0 = inlined_call_operand.vmem [shape: f32[2,4,128], index: 0, kind: input, shape index: {}]
  %s1 = inlined_call_operand.vmem [shape: f32[32,4], index: 1, kind: input, shape index: {}]
  %s2 = inlined_call_operand.hbm [shape: f32[2,32,128], index: 2, kind: output, shape index: {}]
  %s3 = sld [smem:[#allocation0]]
  $region41: #{tpu_custom_call.1} parent=0
    _
  %s5 = ssub.s32 1, %s3
  %s6 = scalar_select 0, %s5, %s3
  $region1: #{tpu_custom_call.1} parent=0
    #allocation2 [shape = 'u8[32768]{0}', space=vmem, size = 0x8000, scoped, tag = 'output window, operand 0']
    #allocation3 [shape = 's32[2]{0}', space=sflag, size = 0x8, scoped, tag = 'scoped memory for tpu_custom_call.1']
    %7 = vsyncpa [#allocation3], 0
    %s8 = scalar_lea.sflag [#allocation3], 1
    %9 = vsyncpa %s8, 0
    loop: start=0, step=1, limit=4
    $region2: #{tpu_custom_call.1} parent=1 // loop_pre_header
      _
    $region3: #{tpu_custom_call.1} parent=1 // loop_header
      %s11 = sphi 0, %s15
      %p12 = scmp.ge.s32.totalorder %s11, 4
      %s18 = sphi 0, %s30
      %s19 = sphi 0, %s26
      %s20 = sphi 0, %s18
      %s21 = sphi 0, %s19
      %s22 = sphi 0, %s20
      %s23 = sphi 0, %s21
      %s35 = sphi 0, %s37
      %s38 = sphi 0, %s35
      %s39 = sphi 0, %s38
      %s55 = sphi 0, %s39
      %s59 = sphi 0, %s59
      %s61 = sphi 0, %s59
      %s62 = sphi 0, %s61
      %s76 = sphi 0, %s62
      %s84 = sphi 0, %s86
      %s87 = sphi 0, %s84
      %s88 = sphi 0, %s87
      %s104 = sphi 0, %s88
    $region4: #{tpu_custom_call.1} parent=1 // loop_header_branch
      %14 = sbr.rel (%p12) target = $region8
    $region5: #{tpu_custom_call.1} parent=1 // loop_body
      %s16 = ssub.s32 %s11, 1
      %s17 = ssub.s32 %s11, 2
      %s24 = sadd.s32 1, %s19
      %p25 = scmp.ge.s32.totalorder %s24, 1
      %s26 = scalar_select %p25, 0, %s24
      %s27 = sadd.s32 1, %s18
      %s28 = scalar_select %p25, %s27, %s18
      %p29 = scmp.ge.s32.totalorder %s28, 2
      %s30 = scalar_select %p29, 0, %s28
      %s31 = ssub.s32 %s18, %s30
      %s32 = ssub.s32 %s19, %s26
      %s33 = sor.u32 %s31, %s32
      %p34 = scmp.eq.s32.totalorder %s33, 0
      %s36 = sadd.s32 %s35, 1
      %s37 = scalar_select %p34, %s35, %s36
      %p40 = pneg %p34
      %p41 = scmp.eq.s32.totalorder %s11, 1
      %p42 = por %p40, %p41
      %p43 = scmp.ne.s32.totalorder %s35, %s38
      %p44 = scmp.eq.s32.totalorder %s11, 0
      %p45 = por %p43, %p44
      %p46 = scmp.ne.s32.totalorder %s35, %s38
      %p47 = scmp.eq.s32.totalorder %s16, 1
      %p48 = por %p46, %p47
      %p49 = scmp.ne.s32.totalorder %s38, %s39
      %p50 = scmp.eq.s32.totalorder %s16, 0
      %p51 = por %p49, %p50
      %p52 = scmp.ne.s32.totalorder %s38, %s39
      %p53 = scmp.eq.s32.totalorder %s17, 1
      %p54 = por %p52, %p53
      %p56 = scmp.ne.s32.totalorder %s39, %s55
      %p57 = scmp.eq.s32.totalorder %s17, 0
      %p58 = por %p56, %p57
      %s60 = sadd.s32 %s59, 1
      %p63 = scmp.eq.s32.totalorder %s11, 1
      %p64 = scmp.ne.s32.totalorder %s59, %s61
      %p65 = scmp.eq.s32.totalorder %s11, 0
      %p66 = por %p64, %p65
      %p67 = scmp.ne.s32.totalorder %s59, %s61
      %p68 = scmp.eq.s32.totalorder %s16, 1
      %p69 = por %p67, %p68
      %p70 = scmp.ne.s32.totalorder %s61, %s62
      %p71 = scmp.eq.s32.totalorder %s16, 0
      %p72 = por %p70, %p71
      %p73 = scmp.ne.s32.totalorder %s61, %s62
      %p74 = scmp.eq.s32.totalorder %s17, 1
      %p75 = por %p73, %p74
      %p77 = scmp.ne.s32.totalorder %s62, %s76
      %p78 = scmp.eq.s32.totalorder %s17, 0
      %p79 = por %p77, %p78
      %s80 = ssub.s32 %s18, %s30
      %s81 = ssub.s32 %s19, %s26
      %s82 = sor.u32 %s80, %s81
      %p83 = scmp.eq.s32.totalorder %s82, 0
      %s85 = sadd.s32 %s84, 1
      %s86 = scalar_select %p83, %s84, %s85
      %p89 = pneg %p83
      %p90 = scmp.eq.s32.totalorder %s11, 1
      %p91 = por %p89, %p90
      %p92 = scmp.ne.s32.totalorder %s84, %s87
      %p93 = scmp.eq.s32.totalorder %s11, 0
      %p94 = por %p92, %p93
      %p95 = scmp.ne.s32.totalorder %s84, %s87
      %p96 = scmp.eq.s32.totalorder %s16, 1
      %p97 = por %p95, %p96
      %p98 = scmp.ne.s32.totalorder %s87, %s88
      %p99 = scmp.eq.s32.totalorder %s16, 0
      %p100 = por %p98, %p99
      %p101 = scmp.ne.s32.totalorder %s87, %s88
      %p102 = scmp.eq.s32.totalorder %s17, 1
      %p103 = por %p101, %p102
      %p105 = scmp.ne.s32.totalorder %s88, %s104
      %p106 = scmp.eq.s32.totalorder %s17, 0
      %p107 = por %p105, %p106
      %p108 = scmp.le.s32.totalorder 1, %s11
      %p109 = scmp.lt.s32.totalorder %s11, 3
      %p110 = pnand %p108, %p109
      %p111 = pneg %p110
      // Predicated region
      $region9: #{tpu_custom_call.1} parent=5 // pred_check
        _
      $region10: #{tpu_custom_call.1} parent=5 // pred_check_branch
        %113 = sbr.rel (%p110) target = $region12
      $region11: #{tpu_custom_call.1} parent=5 // pred_region
        %s114 = ssub.s32 %s11, 1
        // Predicated region
        $region13: #{tpu_custom_call.1} parent=11 // pred_check
          %p115 = pneg %p72
        $region14: #{tpu_custom_call.1} parent=11 // pred_check_branch
          %117 = sbr.rel (%p115) target = $region16
        $region15: #{tpu_custom_call.1} parent=11 // pred_region
          _
        $region16: #{tpu_custom_call.1} parent=11 // pred_fallthru
          _
      $region12: #{tpu_custom_call.1} parent=5 // pred_fallthru
        _
      %p118 = scmp.lt.s32.totalorder %s11, 2
      // Predicated region
      $region17: #{tpu_custom_call.1} parent=5 // pred_check
        %p119 = pneg %p118
      $region18: #{tpu_custom_call.1} parent=5 // pred_check_branch
        %121 = sbr.rel (%p119) target = $region20
      $region19: #{tpu_custom_call.1} parent=5 // pred_region
        // Predicated region
        $region21: #{tpu_custom_call.1} parent=19 // pred_check
          %p122 = pneg %p45
        $region22: #{tpu_custom_call.1} parent=19 // pred_check_branch
          %124 = sbr.rel (%p122) target = $region24
        $region23: #{tpu_custom_call.1} parent=19 // pred_region
          %p125 = scmp.lt.s32.totalorder %s18, 1
          %s126 = scalar_select %p125, %s18, 1
          %p127 = scmp.lt.s32.totalorder %s19, 0
          %s128 = scalar_select %p127, %s19, 0
          %s129 = sadd.s32 %s128, %s126
          %s130 = smul.addr %s129, 4
          %s131 = scalar_lea.vmem %s0, %s130
        $region24: #{tpu_custom_call.1} parent=19 // pred_fallthru
          _
      $region20: #{tpu_custom_call.1} parent=5 // pred_fallthru
        _
      %p132 = scmp.le.s32.totalorder 1, %s11
      %p133 = scmp.lt.s32.totalorder %s11, 3
      %p134 = pnand %p132, %p133
      %p135 = pneg %p134
      // Predicated region
      $region25: #{tpu_custom_call.1} parent=5 // pred_check
        _
      $region26: #{tpu_custom_call.1} parent=5 // pred_check_branch
        %137 = sbr.rel (%p134) target = $region28
      $region27: #{tpu_custom_call.1} parent=5 // pred_region
        %s138 = ssub.s32 %s11, 1
        %p139 = scmp.lt.s32.totalorder %s20, 1
        %s140 = scalar_select %p139, %s20, 1
        %p141 = scmp.lt.s32.totalorder %s21, 0
        %s142 = scalar_select %p141, %s21, 0
        %s143 = sadd.s32 %s142, %s140
        %s144 = smul.addr %s143, 4
        %s145 = scalar_lea.vmem %s0, %s144
        %p146 = pneg %p51
        %p147 = pneg %p48
        %p148 = pneg %p72
        %p149 = pneg %p69
        %p150 = pneg %p100
        %p151 = pneg %p97
        %s152 = sand.u32 %s87, 1
        %s153 = scalar_lea.sflag [#allocation3], %s152
        %s154 = sand.u32 %s87, 1
        %s155 = smul.addr %s154, 32
        %s156 = scalar_lea.vmem [#allocation2], %s155
        %p157 = scmp.lt.s32.totalorder %s20, 1
        %s158 = scalar_select %p157, %s20, 1
        %p159 = scmp.lt.s32.totalorder %s21, 0
        %s160 = scalar_select %p159, %s21, 0
        %s161 = sadd.s32 %s160, %s158
        %s162 = smul.addr %s161, 4
        %s163 = scalar_lea.vmem %s0, %s162
        %v164 = vld [vmem:[%s1] sm:$0xff]
        %v165 = vld [vmem:[%s1 + $0x8] sm:$0xff]
        %v166 = vld [vmem:[%s1 + $0x10] sm:$0xff]
        %v167 = vld [vmem:[%s1 + $0x18] sm:$0xff]
        %v168 = vld [vmem:[%s163] sm:$0xf]
        %vm169 = vcmask 31744
        %v171 = vsel %vm169, %v164, 0
        %v174 = vsel %vm169, %v165, 0
        %v177 = vsel %vm169, %v166, 0
        %v180 = vsel %vm169, %v167, 0
        %vm182 = vcmask 1043456
        %v184 = vsel %vm182, %v168, 0
        %186 = vmatprep.subr.mxu0 0.0
        %187 = vmatpush1.msra.mxu0 %v184
        %188 = vmatprep.subr.mxu0 0.0
        %189 = vmatpush1.msra.mxu0 0.0
        %190 = vmatprep.subr.mxu0 0.0
        %191 = vmatpush1.msra.mxu0 0.0
        %192 = vmatprep.subr.mxu0 0.0
        %193 = vmatpush1.msra.mxu0 0.0
        %194 = vmatprep.subr.mxu0 0.0
        %195 = vmatpush1.msra.mxu0 0.0
        %196 = vmatprep.subr.mxu0 0.0
        %197 = vmatpush1.msra.mxu0 0.0
        %198 = vmatprep.subr.mxu0 0.0
        %199 = vmatpush1.msra.mxu0 0.0
        %200 = vmatprep.subr.mxu0 0.0
        %201 = vmatpush1.msra.mxu0 0.0
        %202 = vmatprep.subr.mxu0 0.0
        %203 = vmatpush1.msra.mxu0 0.0
        %204 = vmatprep.subr.mxu0 0.0
        %205 = vmatpush1.msra.mxu0 0.0
        %206 = vmatprep.subr.mxu0 0.0
        %207 = vmatpush1.msra.mxu0 0.0
        %208 = vmatprep.subr.mxu0 0.0
        %209 = vmatpush1.msra.mxu0 0.0
        %210 = vmatprep.subr.mxu0 0.0
        %211 = vmatpush1.msra.mxu0 0.0
        %212 = vmatprep.subr.mxu0 0.0
        %213 = vmatpush1.msra.mxu0 0.0
        %214 = vmatprep.subr.mxu0 0.0
        %215 = vmatpush1.msra.mxu0 0.0
        %216 = vmatprep.subr.mxu0 0.0
        %217 = vmatpush1.msra.mxu0 0.0
        %218 = vmatprep.subr.mxu0 0.0
        %219 = vmatpush1.msra.mxu0 0.0
        %220 = vmatprep.subr.mxu0 0.0
        %221 = vmatpush1.msra.mxu0 0.0
        %222 = vmatprep.subr.mxu0 0.0
        %223 = vmatpush1.msra.mxu0 0.0
        %224 = vmatprep.subr.mxu0 0.0
        %225 = vmatpush1.msra.mxu0 0.0
        %226 = vmatprep.subr.mxu0 0.0
        %227 = vmatpush1.msra.mxu0 0.0
        %228 = vmatprep.subr.mxu0 0.0
        %229 = vmatpush1.msra.mxu0 0.0
        %230 = vmatprep.subr.mxu0 0.0
        %231 = vmatpush1.msra.mxu0 0.0
        %232 = vmatprep.subr.mxu0 0.0
        %233 = vmatpush1.msra.mxu0 0.0
        %234 = vmatprep.subr.mxu0 0.0
        %235 = vmatpush1.msra.mxu0 0.0
        %236 = vmatprep.subr.mxu0 0.0
        %237 = vmatpush1.msra.mxu0 0.0
        %238 = vmatprep.subr.mxu0 0.0
        %239 = vmatpush1.msra.mxu0 0.0
        %240 = vmatprep.subr.mxu0 0.0
        %241 = vmatpush1.msra.mxu0 0.0
        %242 = vmatprep.subr.mxu0 0.0
        %243 = vmatpush1.msra.mxu0 0.0
        %244 = vmatprep.subr.mxu0 0.0
        %245 = vmatpush1.msra.mxu0 0.0
        %246 = vmatprep.subr.mxu0 0.0
        %247 = vmatpush1.msra.mxu0 0.0
        %248 = vmatprep.subr.mxu0 0.0
        %249 = vmatpush1.msra.mxu0 0.0
        %250 = vmatprep.mubr.f32.mxu0 0.0
        %251 = vmatmul.mubr.f32.gmra.mrb[0].mxu0 %v171
        %v252 = vpop.f32.mrb[0].mxu0
        %v253 = vadd.f32 0.0, %v252
        %v254 = vpop.f32.mrb[0].mxu0
        %255 = vmatprep.mubr.f32.mxu0 0.0
        %256 = vmatmul.mubr.f32.gmra.mrb[0].mxu0 %v174
        %v257 = vpop.f32.mrb[0].mxu0
        %v258 = vadd.f32 0.0, %v257
        %v259 = vpop.f32.mrb[0].mxu0
        %260 = vmatprep.mubr.f32.mxu0 0.0
        %261 = vmatmul.mubr.f32.gmra.mrb[0].mxu0 %v177
        %v262 = vpop.f32.mrb[0].mxu0
        %v263 = vadd.f32 0.0, %v262
        %v264 = vpop.f32.mrb[0].mxu0
        %265 = vmatprep.mubr.f32.mxu0 0.0
        %266 = vmatmul.mubr.f32.gmra.mrb[0].mxu0 %v180
        %v267 = vpop.f32.mrb[0].mxu0
        %v268 = vadd.f32 0.0, %v267
        %v269 = vpop.f32.mrb[0].mxu0
        %270 = vdwg.mxu0
        %271 = vst [vmem:[%s156] sm:$0xff] %v253
        %272 = vst [vmem:[%s156 + $0x8] sm:$0xff] %v258
        %273 = vst [vmem:[%s156 + $0x10] sm:$0xff] %v263
        %274 = vst [vmem:[%s156 + $0x18] sm:$0xff] %v268
        %s275 = sand.u32 %s87, 1
        %s276 = scalar_lea.sflag [#allocation3], %s275
        %s277 = sand.u32 %s87, 1
        %s278 = smul.addr %s277, 32
        %s279 = scalar_lea.vmem [#allocation2], %s278
        // Predicated region
        $region29: #{tpu_custom_call.1} parent=27 // pred_check
          %p280 = pneg %p97
        $region30: #{tpu_custom_call.1} parent=27 // pred_check_branch
          %282 = sbr.rel (%p280) target = $region32
        $region31: #{tpu_custom_call.1} parent=27 // pred_region
          %s284 = ssub.s32 512, 512
          %285 = vsyncadd %s276, %s284
          %s286 = smul.addr %s20, 4
          %s287 = sadd.s32 %s21, %s286
          %s288 = smul.addr %s287, 128
          %s289 = scalar_lea.hbm %s2, %s288
          %s290 = sshll.u32 %s279, 4
          %s291 = int_to_ptr.vmem [resolvable:$true] %s290
          %296 = dma.vmem_to_hbm [thread:$0]  %s291, 512, %s289, %s276, 128, 128, 8
        $region32: #{tpu_custom_call.1} parent=27 // pred_fallthru
          _
      $region28: #{tpu_custom_call.1} parent=5 // pred_fallthru
        _
      %p297 = scmp.le.s32.totalorder 2, %s11
      // Predicated region
      $region33: #{tpu_custom_call.1} parent=5 // pred_check
        %p298 = pneg %p297
      $region34: #{tpu_custom_call.1} parent=5 // pred_check_branch
        %300 = sbr.rel (%p298) target = $region36
      $region35: #{tpu_custom_call.1} parent=5 // pred_region
        %s301 = ssub.s32 %s11, 2
        // Predicated region
        $region37: #{tpu_custom_call.1} parent=35 // pred_check
          %p302 = pneg %p103
        $region38: #{tpu_custom_call.1} parent=35 // pred_check_branch
          %304 = sbr.rel (%p302) target = $region40
        $region39: #{tpu_custom_call.1} parent=35 // pred_region
          %s305 = sand.u32 %s88, 1
          %s306 = scalar_lea.sflag [#allocation3], %s305
          %s307 = sand.u32 %s88, 1
          %s308 = smul.addr %s307, 32
          %s309 = scalar_lea.vmem [#allocation2], %s308
          %310 = dma.done %s306, 512
        $region40: #{tpu_custom_call.1} parent=35 // pred_fallthru
          _
      $region36: #{tpu_custom_call.1} parent=5 // pred_fallthru
        _
    $region6: #{tpu_custom_call.1} parent=1 // loop_footer
      %s15 = sadd.s32 1, %s11
    $region7: #{tpu_custom_call.1} parent=1 // loop_footer_branch
      %10 = sbr.rel target = $region3
    $region8: #{tpu_custom_call.1} parent=1 // loop_exit
      _
    %311 = vsyncpa [#allocation3], 1
    %s312 = scalar_lea.sflag [#allocation3], 1
    %313 = vsyncpa %s312, 1

</llo_original>
